<compile_context>
chip_gen: v5e
topology: v5e:2x2
jax: 0.10.0
libtpu: 0.0.40
codegen_flags: <defaults>
</compile_context>

<pallas_src>
import jax
import jax.numpy as jnp
from jax.experimental import pallas as pl
from jax.experimental.pallas import tpu as pltpu

SELU_ALPHA = 1.6732632423543772
SELU_SCALE = 1.0507009873554804


def _round_up(n, m):
    return ((n + m - 1) // m) * m


def _make_dsm_kernel(n_emb, temp, k, risks, use_diags, x_rows, aligned):
    """Fused forward kernel (feature-major / batch-in-lanes layout)."""

    def selu(v):
        # exp argument clamped to keep the EUP operand bounded on padded rows
        return SELU_SCALE * jnp.where(
            v > 0.0, v, SELU_ALPHA * (jnp.exp(jnp.minimum(v, 0.0)) - 1.0))

    def kernel(*refs):
        idx = 0
        in_ref = refs[idx]; idx += 1                       # (x_rows[+risks], TB)
        emb_refs = refs[idx:idx + n_emb]; idx += n_emb     # (hidden, prev)
        wcat_ref = refs[idx]; idx += 1                     # (3k, lastdim[_pad])
        bcat_ref = refs[idx]; idx += 1                     # (3k, 1)
        extra_ref = refs[idx]; idx += 1                    # (2k|3k, risks|1)
        out_ref = refs[idx]                                # (3k, TB)

        if use_diags:
            xrep = in_ref[0:x_rows, :]
            diags_t = in_ref[x_rows:x_rows + risks, :]     # (risks, TB)
        else:
            xrep = in_ref[...]

        # embedding: Sequential(Linear(no bias), ReLU6) per hidden layer
        for w_ref in emb_refs:
            xrep = jnp.clip(
                jnp.dot(w_ref[...], xrep, preferred_element_type=jnp.float32),
                0.0, 6.0)

        # one wide head matmul: shapeg | scaleg | gate stacked along sublanes
        h = jnp.dot(wcat_ref[...], xrep,
                    preferred_element_type=jnp.float32) + bcat_ref[...]

        extra = extra_ref[...]
        if use_diags:
            if risks <= 4:
                # tiny contraction dim: unrolled VPU broadcast-MAC
                base = extra[:, 0:1] * diags_t[0:1, :]
                for r in range(1, risks):
                    base = base + extra[:, r:r + 1] * diags_t[r:r + 1, :]
            else:
                base = jnp.dot(extra, diags_t,
                               preferred_element_type=jnp.float32)
        else:
            # diags == ones -> per-row constant column, lane-broadcast add
            base = extra

        if aligned:
            # 2k is a multiple of 8: two aligned sub-stores, no sublane mask,
            # no wasted exp on the gate rows.
            out_ref[0:2 * k, :] = selu(h[0:2 * k, :]) + base
            out_ref[2 * k:3 * k, :] = h[2 * k:3 * k, :] / temp
        else:
            row = jax.lax.broadcasted_iota(jnp.int32, h.shape, 0)
            out_ref[...] = jnp.where(row < 2 * k, selu(h), h / temp) + base

    return kernel


def dsm_forward(x, params, diags=None, *, k, risks, temp, risk=1,
                tile_batch=8192):
    """Pallas implementation of DeepSurvivalMachinesTorch.forward.

    Linear weights in `params` are stored as (in_features, out_features) and
    biases as (1, k); the wrapper transposes them for the feature-major
    kernel layout and transposes the (3k, batch) output slab back.
    """
    f32 = jnp.float32
    batch, inputdim = x.shape
    use_diags = diags is not None

    emb_ws_t = [w.astype(f32).T for w in params["emb"]]          # (hidden, prev)
    lastdim = params["emb"][-1].shape[1] if params["emb"] else inputdim

    wsh, bsh = params["shapeg"][risk - 1]
    wsc, bsc = params["scaleg"][risk - 1]
    wg = params["gate"][risk - 1]

    # Fused head weight / bias (gate head has no bias), stacked on rows.
    w_cat_t = jnp.concatenate(
        [wsh.T, wsc.T, wg.T], axis=0).astype(f32)                # (3k, lastdim)
    b_cat = jnp.concatenate(
        [bsh.reshape(k, 1), bsc.reshape(k, 1), jnp.zeros((k, 1), f32)],
        axis=0).astype(f32)                                      # (3k, 1)

    # Risk-parameter tables (k, risks): column ev = shape[ev][:, risk-1].
    shape_rt = jnp.stack(
        [params["shape"][ev][:, risk - 1] for ev in range(risks)],
        axis=1).astype(f32)
    scale_rt = jnp.stack(
        [params["scale"][ev][:, risk - 1] for ev in range(risks)],
        axis=1).astype(f32)

    aligned = (2 * k) % 8 == 0
    if use_diags:
        rows = [shape_rt, scale_rt]
        if not aligned:
            rows.append(jnp.zeros((k, risks), f32))  # gate rows for masked path
        extra = jnp.concatenate(rows, axis=0)        # (2k|3k, risks)
    else:
        # Default diags is all-ones -> base is a per-row constant added
        # post-activation; diags / rt tables never reach the kernel.
        rows = [jnp.sum(shape_rt, axis=1, keepdims=True),
                jnp.sum(scale_rt, axis=1, keepdims=True)]
        if not aligned:
            rows.append(jnp.zeros((k, 1), f32))
        extra = jnp.concatenate(rows, axis=0)        # (2k|3k, 1)

    # ---- batch tiling: TB multiple of 128 (lane-dense), default 8192 ----
    batch128 = _round_up(batch, 128)
    TB = max(128, min(_round_up(tile_batch, 128), batch128))
    padded = _round_up(batch, TB)
    # v7x megacore: keep >= 2 grid steps (one per TensorCore) whenever the
    # batch spans at least two lane tiles.
    if padded // TB < 2 and batch128 >= 256:
        TB = _round_up((batch + 1) // 2, 128)
        padded = _round_up(batch, TB)
    grid = (padded // TB,)

    # ---- streamed operand: [x^T ; diags^T] fused along the sublane axis ----
    x_t = x.astype(f32).T                                        # (inputdim, batch)
    if padded != batch:
        x_t = jnp.pad(x_t, ((0, 0), (0, padded - batch)))
    if use_diags:
        ip = _round_up(inputdim, 8)   # align diags rows to a sublane tile
        if ip != inputdim:
            x_t = jnp.pad(x_t, ((0, ip - inputdim), (0, 0)))
            # match the padded input dim on the first matmul weight
            if emb_ws_t:
                emb_ws_t[0] = jnp.pad(emb_ws_t[0],
                                      ((0, 0), (0, ip - inputdim)))
            else:
                w_cat_t = jnp.pad(w_cat_t, ((0, 0), (0, ip - inputdim)))
        d_t = diags.astype(f32).T                                # (risks, batch)
        if padded != batch:
            d_t = jnp.pad(d_t, ((0, 0), (0, padded - batch)))
        in_t = jnp.concatenate([x_t, d_t], axis=0)               # (ip+risks, padded)
        x_rows = ip
    else:
        in_t = x_t
        x_rows = inputdim

    F_in = in_t.shape[0]

    def stream_spec(nrows):
        return pl.BlockSpec((nrows, TB), lambda i: (0, i))

    def resident_spec(shape):
        return pl.BlockSpec(shape, lambda i: (0,) * len(shape))

    inputs = [in_t] + emb_ws_t + [w_cat_t, b_cat, extra]
    in_specs = ([stream_spec(F_in)]
                + [resident_spec(w.shape) for w in emb_ws_t]
                + [resident_spec(w_cat_t.shape),
                   resident_spec(b_cat.shape),
                   resident_spec(extra.shape)])
    out_spec = stream_spec(3 * k)
    out_shape = jax.ShapeDtypeStruct((3 * k, padded), f32)

    # Advisory cost estimate for the XLA scheduler.
    emb_flops = 0
    prev = inputdim
    for w in params["emb"]:
        emb_flops += 2 * prev * w.shape[1]
        prev = w.shape[1]
    flops = padded * (emb_flops + 2 * lastdim * 3 * k
                      + (2 * risks * 2 * k if use_diags else 0))
    weight_elems = (sum(int(w.size) for w in emb_ws_t) + int(w_cat_t.size)
                    + int(b_cat.size) + int(extra.size))
    bytes_accessed = 4 * (padded * (F_in + 3 * k) + weight_elems)
    cost = pl.CostEstimate(flops=int(flops),
                           transcendentals=int(padded * 2 * k),
                           bytes_accessed=int(bytes_accessed))

    kernel = _make_dsm_kernel(len(emb_ws_t), float(temp), k, risks, use_diags,
                              x_rows, aligned)

    out = pl.pallas_call(
        kernel,
        out_shape=out_shape,
        grid=grid,
        in_specs=in_specs,
        out_specs=out_spec,
        compiler_params=pltpu.CompilerParams(
            dimension_semantics=("parallel",),
            vmem_limit_bytes=32 * 1024 * 1024),
        cost_estimate=cost,
    )(*inputs)

    out = out[:, :batch]                      # (3k, batch) lane-dense slab
    return out[0:k, :].T, out[k:2 * k, :].T, out[2 * k:3 * k, :].T


def _reference_forward(x, params, diags, *, k, risks, temp, risk=1):
    """Pure-JAX reference mirroring the PyTorch semantics (float32)."""
    xrep = x
    for w in params["emb"]:
        xrep = jnp.clip(xrep @ w, 0.0, 6.0)
    batch = x.shape[0]
    if diags is None:
        diags = jnp.ones((batch, risks), dtype=jnp.float32)
    shape_rt = jnp.stack(
        [params["shape"][ev][:, risk - 1] for ev in range(risks)], axis=0)
    scale_rt = jnp.stack(
        [params["scale"][ev][:, risk - 1] for ev in range(risks)], axis=0)
    shape_b = diags @ shape_rt
    scale_b = diags @ scale_rt

    def selu(v):
        return SELU_SCALE * jnp.where(v > 0.0, v,
                                      SELU_ALPHA * (jnp.exp(v) - 1.0))

    wsh, bsh = params["shapeg"][risk - 1]
    wsc, bsc = params["scaleg"][risk - 1]
    wg = params["gate"][risk - 1]
    return (selu(xrep @ wsh + bsh) + shape_b,
            selu(xrep @ wsc + bsc) + scale_b,
            (xrep @ wg) / temp)


def init_params(key, inputdim, k, layers, risks):
    """Deterministic parameter init matching the module's shapes."""
    params = {"emb": [], "shape": [], "scale": [],
              "shapeg": [], "scaleg": [], "gate": []}
    prevdim = inputdim
    for hidden in layers:
        key, sub = jax.random.split(key)
        params["emb"].append(
            0.1 * jax.random.normal(sub, (prevdim, hidden), dtype=jnp.float32))
        prevdim = hidden
    lastdim = prevdim
    for _ in range(risks):
        # shape/scale ParameterDict entries init to -ones((k, risks))
        params["shape"].append(-jnp.ones((k, risks), dtype=jnp.float32))
        params["scale"].append(-jnp.ones((k, risks), dtype=jnp.float32))
        key, k1, k2, k3, k4, k5 = jax.random.split(key, 6)
        params["shapeg"].append(
            (0.1 * jax.random.normal(k1, (lastdim, k), dtype=jnp.float32),
             0.1 * jax.random.normal(k2, (1, k), dtype=jnp.float32)))
        params["scaleg"].append(
            (0.1 * jax.random.normal(k3, (lastdim, k), dtype=jnp.float32),
             0.1 * jax.random.normal(k4, (1, k), dtype=jnp.float32)))
        params["gate"].append(
            0.1 * jax.random.normal(k5, (lastdim, k), dtype=jnp.float32))
    return params


if __name__ == "__main__":
    batch, inputdim, k, risks = 12, 16, 8, 2   # batch not a multiple of 8 on purpose
    layers = (32, 16)
    temp = 1000.0

    key = jax.random.PRNGKey(0)
    key, kx, kd = jax.random.split(key, 3)
    x = jax.random.normal(kx, (batch, inputdim), dtype=jnp.float32)
    params = init_params(key, inputdim, k, layers, risks)

    # Path 1: explicit (non-trivial) diags -> VPU broadcast-MAC mixing path.
    diags = 0.5 + jax.random.uniform(kd, (batch, risks), dtype=jnp.float32)
    shape_o, scale_o, gate_o = dsm_forward(
        x, params, diags, k=k, risks=risks, temp=temp, risk=1)
    jax.block_until_ready((shape_o, scale_o, gate_o))
    ref = _reference_forward(x, params, diags, k=k, risks=risks, temp=temp,
                             risk=1)
    assert shape_o.shape == (batch, k)
    assert jnp.allclose(shape_o, ref[0], atol=1e-5, rtol=1e-5)
    assert jnp.allclose(scale_o, ref[1], atol=1e-5, rtol=1e-5)
    assert jnp.allclose(gate_o, ref[2], atol=1e-5, rtol=1e-5)

    # Path 2: diags=None (module default, all-ones) -> folded constant path.
    shape_o2, scale_o2, gate_o2 = dsm_forward(
        x, params, None, k=k, risks=risks, temp=temp, risk=1)
    jax.block_until_ready((shape_o2, scale_o2, gate_o2))
    ref2 = _reference_forward(x, params, None, k=k, risks=risks, temp=temp,
                              risk=1)
    assert jnp.allclose(shape_o2, ref2[0], atol=1e-5, rtol=1e-5)
    assert jnp.allclose(scale_o2, ref2[1], atol=1e-5, rtol=1e-5)
    assert jnp.allclose(gate_o2, ref2[2], atol=1e-5, rtol=1e-5)

    # Path 3: batch spanning multiple lane tiles -> grid >= 2 (v7x megacore).
    key, kx2, kd2 = jax.random.split(key, 3)
    batch2 = 300
    x2 = jax.random.normal(kx2, (batch2, inputdim), dtype=jnp.float32)
    diags2 = 0.5 + jax.random.uniform(kd2, (batch2, risks), dtype=jnp.float32)
    s3, c3, g3 = dsm_forward(x2, params, diags2, k=k, risks=risks, temp=temp,
                             risk=1)
    jax.block_until_ready((s3, c3, g3))
    ref3 = _reference_forward(x2, params, diags2, k=k, risks=risks, temp=temp,
                              risk=1)
    assert jnp.allclose(s3, ref3[0], atol=1e-5, rtol=1e-5)
    assert jnp.allclose(c3, ref3[1], atol=1e-5, rtol=1e-5)
    assert jnp.allclose(g3, ref3[2], atol=1e-5, rtol=1e-5)

    print("KERNEL_OK")
</pallas_src>

<mosaic_0001>
module attributes {stable_mosaic.version = 11 : i64} {
  func.func @kernel(%arg0: i32, %arg1: memref<18x128xf32, #tpu.memory_space<vmem>>, %arg2: memref<32x16xf32, #tpu.memory_space<vmem>>, %arg3: memref<16x32xf32, #tpu.memory_space<vmem>>, %arg4: memref<24x16xf32, #tpu.memory_space<vmem>>, %arg5: memref<24x1xf32, #tpu.memory_space<vmem>>, %arg6: memref<16x2xf32, #tpu.memory_space<vmem>>, %arg7: memref<24x128xf32, #tpu.memory_space<vmem>>) attributes {dimension_semantics = [#tpu.dimension_semantics<parallel>], iteration_bounds = array<i64: 1>, scalar_prefetch = 0 : i64, scratch_operands = 0 : i64, tpu.core_type = #tpu.core_type<tc>, window_params = [{transform_indices = @transform_0, window_bounds = array<i64: 18, 128>}, {pipeline_mode = #tpu.pipeline_mode<synchronous>, transform_indices = @transform_1, window_bounds = array<i64: 32, 16>}, {pipeline_mode = #tpu.pipeline_mode<synchronous>, transform_indices = @transform_2, window_bounds = array<i64: 16, 32>}, {pipeline_mode = #tpu.pipeline_mode<synchronous>, transform_indices = @transform_3, window_bounds = array<i64: 24, 16>}, {pipeline_mode = #tpu.pipeline_mode<synchronous>, transform_indices = @transform_4, window_bounds = array<i64: 24, 1>}, {pipeline_mode = #tpu.pipeline_mode<synchronous>, transform_indices = @transform_5, window_bounds = array<i64: 16, 2>}, {transform_indices = @transform_6, window_bounds = array<i64: 24, 128>}]} {
    %c0 = arith.constant 0 : index
    %c0_0 = arith.constant 0 : index
    %0 = vector.load %arg1[%c0, %c0_0] : memref<18x128xf32, #tpu.memory_space<vmem>>, vector<16x128xf32>
    %c16 = arith.constant 16 : index
    %c0_1 = arith.constant 0 : index
    %1 = vector.load %arg1[%c16, %c0_1] : memref<18x128xf32, #tpu.memory_space<vmem>>, vector<2x128xf32>
    %c0_2 = arith.constant 0 : index
    %c0_3 = arith.constant 0 : index
    %2 = vector.load %arg2[%c0_2, %c0_3] : memref<32x16xf32, #tpu.memory_space<vmem>>, vector<32x16xf32>
    %cst = arith.constant dense<0.000000e+00> : vector<32x128xf32>
    %3 = tpu.matmul %2, %0, %cst {dimension_numbers = #tpu.dot_dimension_numbers<[1], [0], [0], [1], [0, 0, 1, 1], [], []>} : vector<32x16xf32>, vector<16x128xf32>, vector<32x128xf32> -> vector<32x128xf32>
    %cst_4 = arith.constant 0.000000e+00 : f32
    %cst_5 = arith.constant 6.000000e+00 : f32
    %4 = vector.broadcast %cst_4 : f32 to vector<32x128xf32>
    %5 = arith.maximumf %4, %3 : vector<32x128xf32>
    %6 = vector.broadcast %cst_5 : f32 to vector<32x128xf32>
    %7 = arith.minimumf %6, %5 : vector<32x128xf32>
    %c0_6 = arith.constant 0 : index
    %c0_7 = arith.constant 0 : index
    %8 = vector.load %arg3[%c0_6, %c0_7] : memref<16x32xf32, #tpu.memory_space<vmem>>, vector<16x32xf32>
    %cst_8 = arith.constant dense<0.000000e+00> : vector<16x128xf32>
    %9 = tpu.matmul %8, %7, %cst_8 {dimension_numbers = #tpu.dot_dimension_numbers<[1], [0], [0], [1], [0, 0, 1, 1], [], []>} : vector<16x32xf32>, vector<32x128xf32>, vector<16x128xf32> -> vector<16x128xf32>
    %cst_9 = arith.constant 0.000000e+00 : f32
    %cst_10 = arith.constant 6.000000e+00 : f32
    %10 = vector.broadcast %cst_9 : f32 to vector<16x128xf32>
    %11 = arith.maximumf %10, %9 : vector<16x128xf32>
    %12 = vector.broadcast %cst_10 : f32 to vector<16x128xf32>
    %13 = arith.minimumf %12, %11 : vector<16x128xf32>
    %c0_11 = arith.constant 0 : index
    %c0_12 = arith.constant 0 : index
    %14 = vector.load %arg4[%c0_11, %c0_12] : memref<24x16xf32, #tpu.memory_space<vmem>>, vector<24x16xf32>
    %cst_13 = arith.constant dense<0.000000e+00> : vector<24x128xf32>
    %15 = tpu.matmul %14, %13, %cst_13 {dimension_numbers = #tpu.dot_dimension_numbers<[1], [0], [0], [1], [0, 0, 1, 1], [], []>} : vector<24x16xf32>, vector<16x128xf32>, vector<24x128xf32> -> vector<24x128xf32>
    %c0_14 = arith.constant 0 : index
    %c0_15 = arith.constant 0 : index
    %16 = vector.load %arg5[%c0_14, %c0_15] : memref<24x1xf32, #tpu.memory_space<vmem>>, vector<24x1xf32>
    %17 = vector.broadcast %16 : vector<24x1xf32> to vector<24x128xf32>
    %18 = arith.addf %15, %17 : vector<24x128xf32>
    %c0_16 = arith.constant 0 : index
    %c0_17 = arith.constant 0 : index
    %19 = vector.load %arg6[%c0_16, %c0_17] : memref<16x2xf32, #tpu.memory_space<vmem>>, vector<16x2xf32>
    %20 = vector.extract_strided_slice %19 {offsets = [0, 0], sizes = [16, 1], strides = [1, 1]} : vector<16x2xf32> to vector<16x1xf32>
    %21 = vector.extract_strided_slice %1 {offsets = [0, 0], sizes = [1, 128], strides = [1, 1]} : vector<2x128xf32> to vector<1x128xf32>
    %22 = vector.broadcast %20 : vector<16x1xf32> to vector<16x128xf32>
    %23 = vector.broadcast %21 : vector<1x128xf32> to vector<16x128xf32>
    %24 = arith.mulf %22, %23 : vector<16x128xf32>
    %25 = vector.extract_strided_slice %19 {offsets = [0, 1], sizes = [16, 1], strides = [1, 1]} : vector<16x2xf32> to vector<16x1xf32>
    %26 = vector.extract_strided_slice %1 {offsets = [1, 0], sizes = [1, 128], strides = [1, 1]} : vector<2x128xf32> to vector<1x128xf32>
    %27 = vector.broadcast %25 : vector<16x1xf32> to vector<16x128xf32>
    %28 = vector.broadcast %26 : vector<1x128xf32> to vector<16x128xf32>
    %29 = arith.mulf %27, %28 : vector<16x128xf32>
    %30 = arith.addf %24, %29 : vector<16x128xf32>
    %31 = vector.extract_strided_slice %18 {offsets = [0, 0], sizes = [16, 128], strides = [1, 1]} : vector<24x128xf32> to vector<16x128xf32>
    %cst_18 = arith.constant 0.000000e+00 : f32
    %32 = vector.broadcast %cst_18 : f32 to vector<16x128xf32>
    %33 = arith.cmpf ogt, %31, %32 : vector<16x128xf32>
    %cst_19 = arith.constant 0.000000e+00 : f32
    %34 = vector.broadcast %cst_19 : f32 to vector<16x128xf32>
    %35 = arith.minimumf %31, %34 : vector<16x128xf32>
    %36 = math.exp %35 : vector<16x128xf32>
    %cst_20 = arith.constant 1.000000e+00 : f32
    %37 = vector.broadcast %cst_20 : f32 to vector<16x128xf32>
    %38 = arith.subf %36, %37 : vector<16x128xf32>
    %cst_21 = arith.constant 1.67326319 : f32
    %39 = vector.broadcast %cst_21 : f32 to vector<16x128xf32>
    %40 = arith.mulf %39, %38 : vector<16x128xf32>
    %41 = arith.select %33, %31, %40 : vector<16x128xi1>, vector<16x128xf32>
    %cst_22 = arith.constant 1.05070102 : f32
    %42 = vector.broadcast %cst_22 : f32 to vector<16x128xf32>
    %43 = arith.mulf %42, %41 : vector<16x128xf32>
    %44 = arith.addf %43, %30 : vector<16x128xf32>
    %c0_23 = arith.constant 0 : index
    %c0_24 = arith.constant 0 : index
    %45 = vector.load %arg7[%c0_23, %c0_24] : memref<24x128xf32, #tpu.memory_space<vmem>>, vector<16x128xf32>
    tpu.vector_store %arg7[%c0_23, %c0_24], %44 {strides = array<i32>} : memref<24x128xf32, #tpu.memory_space<vmem>>, vector<16x128xf32>,
    %46 = vector.extract_strided_slice %18 {offsets = [16, 0], sizes = [8, 128], strides = [1, 1]} : vector<24x128xf32> to vector<8x128xf32>
    %cst_25 = arith.constant 1.000000e+03 : f32
    %47 = vector.broadcast %cst_25 : f32 to vector<8x128xf32>
    %48 = arith.divf %46, %47 : vector<8x128xf32>
    %c16_26 = arith.constant 16 : index
    %c0_27 = arith.constant 0 : index
    %49 = vector.load %arg7[%c16_26, %c0_27] : memref<24x128xf32, #tpu.memory_space<vmem>>, vector<8x128xf32>
    tpu.vector_store %arg7[%c16_26, %c0_27], %48 {strides = array<i32>} : memref<24x128xf32, #tpu.memory_space<vmem>>, vector<8x128xf32>,
    return
  }
  func.func @transform_0(%arg0: i32) -> (i32, i32) {
    %c0_i32 = arith.constant 0 : i32
    %c0_i32_0 = arith.constant 0 : i32
    return %c0_i32, %arg0 : i32, i32
  }
  func.func @transform_1(%arg0: i32) -> (i32, i32) {
    %c0_i32 = arith.constant 0 : i32
    %c0_i32_0 = arith.constant 0 : i32
    %c0_i32_1 = arith.constant 0 : i32
    return %c0_i32, %c0_i32_0 : i32, i32
  }
  func.func @transform_2(%arg0: i32) -> (i32, i32) {
    %c0_i32 = arith.constant 0 : i32
    %c0_i32_0 = arith.constant 0 : i32
    %c0_i32_1 = arith.constant 0 : i32
    return %c0_i32, %c0_i32_0 : i32, i32
  }
  func.func @transform_3(%arg0: i32) -> (i32, i32) {
    %c0_i32 = arith.constant 0 : i32
    %c0_i32_0 = arith.constant 0 : i32
    %c0_i32_1 = arith.constant 0 : i32
    return %c0_i32, %c0_i32_0 : i32, i32
  }
  func.func @transform_4(%arg0: i32) -> (i32, i32) {
    %c0_i32 = arith.constant 0 : i32
    %c0_i32_0 = arith.constant 0 : i32
    %c0_i32_1 = arith.constant 0 : i32
    return %c0_i32, %c0_i32_0 : i32, i32
  }
  func.func @transform_5(%arg0: i32) -> (i32, i32) {
    %c0_i32 = arith.constant 0 : i32
    %c0_i32_0 = arith.constant 0 : i32
    %c0_i32_1 = arith.constant 0 : i32
    return %c0_i32, %c0_i32_0 : i32, i32
  }
  func.func @transform_6(%arg0: i32) -> (i32, i32) {
    %c0_i32 = arith.constant 0 : i32
    %c0_i32_0 = arith.constant 0 : i32
    return %c0_i32, %arg0 : i32, i32
  }
}

</mosaic_0001>

<llo_original>
// kernel: tpu_custom_call.1
$region0: #{tpu_custom_call.1}
  #allocation0 [shape = 'u32[]', space=smem, size = 0x4, offset = 0x4, fixed_abs, tag = 'smem constant byte address 0x4 - core index']
  #allocation1 [shape = 'u32[72,128]{1,0:T(1,128)}', space=vmem, size = 0x9000, scoped, tag = 'internal scratch']
  %s0 = inlined_call_operand.vmem [shape: f32[18,128], index: 0, kind: input, shape index: {}]
  %s1 = inlined_call_operand.vmem [shape: f32[32,16], index: 1, kind: input, shape index: {}]
  %s2 = inlined_call_operand.vmem [shape: f32[16,32], index: 2, kind: input, shape index: {}]
  %s3 = inlined_call_operand.vmem [shape: f32[24,16], index: 3, kind: input, shape index: {}]
  %s4 = inlined_call_operand.vmem [shape: f32[24,1], index: 4, kind: input, shape index: {}]
  %s5 = inlined_call_operand.vmem [shape: f32[16,2], index: 5, kind: input, shape index: {}]
  %s6 = inlined_call_operand.hbm [shape: f32[24,128], index: 6, kind: output, shape index: {}]
  %s7 = sld [smem:[#allocation0]]
  $region34: #{tpu_custom_call.1} parent=0
    _
  %s9 = ssub.s32 1, %s7
  %s10 = scalar_select 0, %s9, %s7
  $region1: #{tpu_custom_call.1} parent=0
    #allocation2 [shape = 'u8[12288]{0}', space=vmem, size = 0x3000, scoped, tag = 'output window, operand 0, single buffered']
    #allocation3 [shape = 's32[1]{0}', space=sflag, size = 0x4, scoped, tag = 'scoped memory for tpu_custom_call.1']
    %11 = vsyncpa [#allocation3], 0
    // Predicated region
    $region2: #{tpu_custom_call.1} parent=1 // pred_check
      _
    $region3: #{tpu_custom_call.1} parent=1 // pred_check_branch
      %13 = sbr.rel (0) target = $region5
    $region4: #{tpu_custom_call.1} parent=1 // pred_region
      _
    $region5: #{tpu_custom_call.1} parent=1 // pred_fallthru
      _
    // Predicated region
    $region6: #{tpu_custom_call.1} parent=1 // pred_check
      _
    $region7: #{tpu_custom_call.1} parent=1 // pred_check_branch
      %15 = sbr.rel (0) target = $region9
    $region8: #{tpu_custom_call.1} parent=1 // pred_region
      _
    $region9: #{tpu_custom_call.1} parent=1 // pred_fallthru
      _
    // Predicated region
    $region10: #{tpu_custom_call.1} parent=1 // pred_check
      _
    $region11: #{tpu_custom_call.1} parent=1 // pred_check_branch
      %17 = sbr.rel (0) target = $region13
    $region12: #{tpu_custom_call.1} parent=1 // pred_region
      _
    $region13: #{tpu_custom_call.1} parent=1 // pred_fallthru
      _
    // Predicated region
    $region14: #{tpu_custom_call.1} parent=1 // pred_check
      _
    $region15: #{tpu_custom_call.1} parent=1 // pred_check_branch
      %19 = sbr.rel (0) target = $region17
    $region16: #{tpu_custom_call.1} parent=1 // pred_region
      _
    $region17: #{tpu_custom_call.1} parent=1 // pred_fallthru
      _
    // Predicated region
    $region18: #{tpu_custom_call.1} parent=1 // pred_check
      _
    $region19: #{tpu_custom_call.1} parent=1 // pred_check_branch
      %21 = sbr.rel (0) target = $region21
    $region20: #{tpu_custom_call.1} parent=1 // pred_region
      _
    $region21: #{tpu_custom_call.1} parent=1 // pred_fallthru
      _
    // Predicated region
    $region22: #{tpu_custom_call.1} parent=1 // pred_check
      _
    $region23: #{tpu_custom_call.1} parent=1 // pred_check_branch
      %23 = sbr.rel (0) target = $region25
    $region24: #{tpu_custom_call.1} parent=1 // pred_region
      _
    $region25: #{tpu_custom_call.1} parent=1 // pred_fallthru
      _
    %v24 = vld [vmem:[%s0] sm:$0xff]
    %v25 = vld [vmem:[%s0 + $0x8] sm:$0xff]
    %v26 = vld [vmem:[%s0 + $0x10] sm:$0x3]
    %v27 = vld [vmem:[%s1] sm:$0xff]
    %v28 = vld [vmem:[%s1 + $0x8] sm:$0xff]
    %v29 = vld [vmem:[%s1 + $0x10] sm:$0xff]
    %v30 = vld [vmem:[%s1 + $0x18] sm:$0xff]
    %vm31 = vcmask 130048
    %v33 = vsel %vm31, %v27, 0
    %v36 = vsel %vm31, %v28, 0
    %v39 = vsel %vm31, %v29, 0
    %v42 = vsel %vm31, %v30, 0
    %44 = vmatpush.msra.mxu0 0.0
    %45 = vmatpush.msra.mxu0 0.0
    %46 = vmatpush.msra.mxu0 0.0
    %47 = vmatpush.msra.mxu0 0.0
    %48 = vmatpush.msra.mxu0 0.0
    %49 = vmatpush.msra.mxu0 0.0
    %50 = vmatpush.msra.mxu0 0.0
    %51 = vmatpush.msra.mxu0 0.0
    %52 = vmatpush.msra.mxu0 0.0
    %53 = vmatpush.msra.mxu0 0.0
    %54 = vmatpush.msra.mxu0 0.0
    %55 = vmatpush.msra.mxu0 0.0
    %56 = vmatpush.msra.mxu0 0.0
    %57 = vmatpush.msra.mxu0 0.0
    %58 = vmatpush.msra.mxu0 %v25
    %59 = vmatpush.msra.mxu0 %v24
    %60 = vmatmul.f32.gmra.mxu0 %v33
    %v61 = vpop.f32.mrf.mxu0
    %v62 = vadd.f32 0.0, %v61
    %63 = vmatmul.f32.gmra.mxu0 %v36
    %v64 = vpop.f32.mrf.mxu0
    %v65 = vadd.f32 0.0, %v64
    %66 = vmatmul.f32.gmra.mxu0 %v39
    %v67 = vpop.f32.mrf.mxu0
    %v68 = vadd.f32 0.0, %v67
    %69 = vmatmul.f32.gmra.mxu0 %v42
    %v70 = vpop.f32.mrf.mxu0
    %v71 = vadd.f32 0.0, %v70
    %72 = vdwg.mxu0
    %v73 = vmax.f32 %v62, 0.0
    %v74 = vmax.f32 %v65, 0.0
    %v75 = vmax.f32 %v68, 0.0
    %v76 = vmax.f32 %v71, 0.0
    %v77 = vmin.f32 %v73, 6.0
    %v78 = vmin.f32 %v74, 6.0
    %v79 = vmin.f32 %v75, 6.0
    %v80 = vmin.f32 %v76, 6.0
    %v81 = vld [vmem:[%s2] sm:$0xff]
    %v82 = vld [vmem:[%s2 + $0x8] sm:$0xff]
    %vm83 = vcmask 261120
    %v85 = vsel %vm83, %v81, 0
    %v88 = vsel %vm83, %v82, 0
    %90 = vmatpush.msra.mxu0 0.0
    %91 = vmatpush.msra.mxu0 0.0
    %92 = vmatpush.msra.mxu0 0.0
    %93 = vmatpush.msra.mxu0 0.0
    %94 = vmatpush.msra.mxu0 0.0
    %95 = vmatpush.msra.mxu0 0.0
    %96 = vmatpush.msra.mxu0 0.0
    %97 = vmatpush.msra.mxu0 0.0
    %98 = vmatpush.msra.mxu0 0.0
    %99 = vmatpush.msra.mxu0 0.0
    %100 = vmatpush.msra.mxu0 0.0
    %101 = vmatpush.msra.mxu0 0.0
    %102 = vmatpush.msra.mxu0 %v80
    %103 = vmatpush.msra.mxu0 %v79
    %104 = vmatpush.msra.mxu0 %v78
    %105 = vmatpush.msra.mxu0 %v77
    %106 = vmatmul.f32.gmra.mxu0 %v85
    %v107 = vpop.f32.mrf.mxu0
    %v108 = vadd.f32 0.0, %v107
    %109 = vmatmul.f32.gmra.mxu0 %v88
    %v110 = vpop.f32.mrf.mxu0
    %v111 = vadd.f32 0.0, %v110
    %112 = vdwg.mxu0
    %v113 = vmax.f32 %v108, 0.0
    %v114 = vmax.f32 %v111, 0.0
    %v115 = vmin.f32 %v113, 6.0
    %v116 = vmin.f32 %v114, 6.0
    %v117 = vld [vmem:[%s3] sm:$0xff]
    %v118 = vld [vmem:[%s3 + $0x8] sm:$0xff]
    %v119 = vld [vmem:[%s3 + $0x10] sm:$0xff]
    %v120 = vld [vmem:[%s4] sm:$0xff]
    %v121 = vld [vmem:[%s4 + $0x8] sm:$0xff]
    %v122 = vld [vmem:[%s4 + $0x10] sm:$0xff]
    %124 = vset.pattern.permute.xlu0 0
    %125 = vperm.xlu0 %124, %v120
    %v126 = vpop.permute.xlu0 %125
    %129 = vset.pattern.permute.xlu0 0
    %130 = vperm.xlu0 %129, %v121
    %v131 = vpop.permute.xlu0 %130
    %134 = vset.pattern.permute.xlu0 0
    %135 = vperm.xlu0 %134, %v122
    %v136 = vpop.permute.xlu0 %135
    %v139 = vsel %vm31, %v117, 0
    %v142 = vsel %vm31, %v118, 0
    %v145 = vsel %vm31, %v119, 0
    %147 = vmatpush.msra.mxu0 0.0
    %148 = vmatpush.msra.mxu0 0.0
    %149 = vmatpush.msra.mxu0 0.0
    %150 = vmatpush.msra.mxu0 0.0
    %151 = vmatpush.msra.mxu0 0.0
    %152 = vmatpush.msra.mxu0 0.0
    %153 = vmatpush.msra.mxu0 0.0
    %154 = vmatpush.msra.mxu0 0.0
    %155 = vmatpush.msra.mxu0 0.0
    %156 = vmatpush.msra.mxu0 0.0
    %157 = vmatpush.msra.mxu0 0.0
    %158 = vmatpush.msra.mxu0 0.0
    %159 = vmatpush.msra.mxu0 0.0
    %160 = vmatpush.msra.mxu0 0.0
    %161 = vmatpush.msra.mxu0 %v116
    %162 = vmatpush.msra.mxu0 %v115
    %163 = vmatmul.f32.gmra.mxu0 %v139
    %v164 = vpop.f32.mrf.mxu0
    %v165 = vadd.f32 %v126, %v164
    %166 = vmatmul.f32.gmra.mxu0 %v142
    %v167 = vpop.f32.mrf.mxu0
    %v168 = vadd.f32 %v131, %v167
    %169 = vmatmul.f32.gmra.mxu0 %v145
    %v170 = vpop.f32.mrf.mxu0
    %v171 = vadd.f32 %v136, %v170
    %172 = vdwg.mxu0
    %v173 = vld [vmem:[%s5] sm:$0xff]
    %v174 = vld [vmem:[%s5 + $0x8] sm:$0xff]
    %176 = vset.pattern.permute.xlu0 0
    %177 = vperm.xlu0 %176, %v173
    %v178 = vpop.permute.xlu0 %177
    %181 = vset.pattern.permute.xlu0 0
    %182 = vperm.xlu0 %181, %v174
    %v183 = vpop.permute.xlu0 %182
    %v185 = vperm.slane %v26, 0
    %v186 = vmul.f32 %v178, %v185
    %v187 = vmul.f32 %v183, %v185
    %188 = vset.pattern.permute.xlu0 1
    %189 = vperm.xlu0 %188, %v173
    %v190 = vpop.permute.xlu0 %189
    %192 = vset.pattern.permute.xlu0 1
    %193 = vperm.xlu0 %192, %v174
    %v194 = vpop.permute.xlu0 %193
    %v196 = vperm.slane %v26, 1
    %v197 = vmul.f32 %v190, %v196
    %v198 = vmul.f32 %v194, %v196
    %v199 = vadd.f32 %v186, %v197
    %v200 = vadd.f32 %v187, %v198
    %vm201 = vcmp.gt.f32.partialorder %v165, 0.0
    %vm202 = vcmp.gt.f32.partialorder %v168, 0.0
    %v203 = vmin.f32 %v165, 0.0
    %v204 = vmin.f32 %v168, 0.0
    %v205 = vmul.f32 %v203, 1.442695
    %v206 = vpow.pop %v205
    %v207 = vmul.f32 %v204, 1.442695
    %v208 = vpow.pop %v207
    %v209 = vsub.f32 %v206, 1.0
    %v210 = vsub.f32 %v208, 1.0
    %v211 = vmul.f32 %v209, 1.6732632
    %v212 = vmul.f32 %v210, 1.6732632
    %v213 = vsel %vm201, %v165, %v211
    %v214 = vsel %vm202, %v168, %v212
    %v215 = vmul.f32 %v213, 1.050701
    %v216 = vmul.f32 %v214, 1.050701
    %v217 = vadd.f32 %v215, %v199
    %v218 = vadd.f32 %v216, %v200
    %219 = vst [vmem:[#allocation2] sm:$0xff] %v217
    %220 = vst [vmem:[#allocation2 + $0x8] sm:$0xff] %v218
    %v221 = vrcp.pop 1000.0
    %v222 = vmul.f32 1000.0, %v221
    %v223 = vsub.f32 1.0, %v222
    %v224 = vmul.f32 %v221, %v223
    %v225 = vadd.f32 %v221, %v224
    %vm226 = vweird.f32 %v221
    %v227 = vsel %vm226, %v221, %v225
    %v228 = vmul.f32 %v171, %v227
    %229 = vst [vmem:[#allocation2 + $0x10] sm:$0xff] %v228
    // Predicated region
    $region26: #{tpu_custom_call.1} parent=1 // pred_check
      _
    $region27: #{tpu_custom_call.1} parent=1 // pred_check_branch
      %231 = sbr.rel (0) target = $region29
    $region28: #{tpu_custom_call.1} parent=1 // pred_region
      %233 = vsyncadd [#allocation3], 0
      %s234 = sshll.u32 [#allocation2], 4
      %s235 = int_to_ptr.vmem [resolvable:$true] %s234
      %s236 = sshll.u32 %s6, 4
      %s237 = int_to_ptr.hbm [resolvable:$true] %s236
      %242 = dma.vmem_to_hbm [thread:$0]  %s235, 384, %s237, [#allocation3], 128, 128, 8
    $region29: #{tpu_custom_call.1} parent=1 // pred_fallthru
      _
    // Predicated region
    $region30: #{tpu_custom_call.1} parent=1 // pred_check
      _
    $region31: #{tpu_custom_call.1} parent=1 // pred_check_branch
      %244 = sbr.rel (0) target = $region33
    $region32: #{tpu_custom_call.1} parent=1 // pred_region
      %246 = dma.done [#allocation3], 384
    $region33: #{tpu_custom_call.1} parent=1 // pred_fallthru
      _
    %247 = vsyncpa [#allocation3], 1

</llo_original>
